<compile_context>
chip_gen: v7x
topology: tpu7x:2x2x1
jax: 0.10.0
libtpu: 0.0.40
codegen_flags: <defaults>
</compile_context>

<pallas_src>
import functools

import jax
import jax.numpy as jnp
from jax.experimental import pallas as pl
from jax.experimental.pallas import tpu as pltpu


# ---------------------------------------------------------------------------
# Glue (plain JAX): ball query + grouping
# ---------------------------------------------------------------------------
def ball_query(pos1, pos2, radius, n_samples):
    """pos1: (B, N1, 3), pos2: (B, N2, 3) -> idx (B, N2, S) int32.

    pointnet2 ball_query semantics: first n_samples indices i (in increasing i)
    with ||pos1[i] - pos2[j]||^2 < r^2, padded with the first hit; 0 if no hit.
    Uses top_k (O(N1 log S)) instead of a full O(N1 log N1) sort.
    """
    n1 = pos1.shape[1]
    d2 = jnp.sum((pos2[:, :, None, :] - pos1[:, None, :, :]) ** 2, axis=-1)  # (B,N2,N1)
    cand = jnp.where(d2 < radius * radius,
                     jnp.arange(n1, dtype=jnp.int32)[None, None, :],
                     jnp.int32(n1))
    neg_top, _ = jax.lax.top_k(-cand, n_samples)       # S smallest candidates
    order = -neg_top                                   # ascending (first S hits)
    first = order[..., :1]
    first = jnp.where(first == n1, jnp.int32(0), first)
    idx = jnp.where(order == n1, first, order)
    return idx.astype(jnp.int32)


def group_channels_first(pos1, pos2, feats1, feats2, idx):
    """Grouped tensor, channels-first: (B, 3 + C1 + C2, S, N2).

    Channel order matches PyTorch QueryAndGroup(use_xyz=True):
    [relative xyz (3), grouped features1 (C1), tiled features2 (C2)].
    """
    def per_batch(p1, p2, f1, f2, ix):
        n2, s = ix.shape
        gxyz = jnp.transpose(p1[ix] - p2[:, None, :], (2, 1, 0))          # (3, S, N2)
        gf1 = jnp.transpose(f1[:, ix], (0, 2, 1))                         # (C1, S, N2)
        gf2 = jnp.broadcast_to(f2[:, None, :], (f2.shape[0], s, n2))      # (C2, S, N2)
        return jnp.concatenate([gxyz, gf1, gf2], axis=0)

    return jax.vmap(per_batch)(pos1, pos2, feats1, feats2, idx)


# ---------------------------------------------------------------------------
# Pallas kernel: shared MLP (bf16 matmul + folded-BN bias + ReLU) + max-pool
# ---------------------------------------------------------------------------
def _mlp_maxpool_kernel(n_layers, n_samples, tile_n2, g_ref, *refs):
    """One (batch, N2-tile) grid step.

    g_ref : (1, 1, Cin, S*TN2) bf16, lane index = s*TN2 + n_local (s-major)
    refs  : [w0, b0, w1, b1, ..., o_ref]
            w_l : (H_l, C_l) bf16  (BN scale folded in)
            b_l : (H_l, 1)   f32   (folded BN bias)
    o_ref : (1, Cout, TN2) f32
    """
    o_ref = refs[-1]
    param_refs = refs[:-1]

    x = g_ref[0, 0]                                    # (Cin, S*TN2) bf16
    for l in range(n_layers):
        w = param_refs[2 * l][...]                     # (H_l, C_l) bf16
        b = param_refs[2 * l + 1][...]                 # (H_l, 1)  f32
        y = jax.lax.dot_general(
            w, x, (((1,), (0,)), ((), ())),
            preferred_element_type=jnp.float32)        # bf16 MXU, f32 accumulate
        y = jnp.maximum(y + b, 0.0)                    # folded BN bias + ReLU (f32)
        x = y.astype(jnp.bfloat16) if l + 1 < n_layers else y

    # Max-pool over the samples axis: s-major contiguous lane segments.
    acc = x[:, 0:tile_n2]
    for s in range(1, n_samples):
        acc = jnp.maximum(acc, x[:, s * tile_n2:(s + 1) * tile_n2])
    o_ref[0] = acc                                     # (Cout, TN2), lane-dense


def _pick_n2_tile(n2):
    for t in (512, 256, 128):
        if n2 % t == 0:
            return t
    return n2      # small / oddly-sized N2: single tile per batch


def flow_embedding_forward(pos1, feats1, pos2, feats2, params, *, radius, n_samples):
    """Returns (new_xyz = pos2 (B, N2, 3), new_features (B, mlp[-1], N2))."""
    ws, scales, biases = params

    idx = ball_query(pos1, pos2, radius, n_samples)
    grouped_cf = group_channels_first(pos1, pos2, feats1, feats2, idx)  # (B,Cin,S,N2) f32

    b, cin, s, n2 = grouped_cf.shape
    cout = ws[-1].shape[1]
    tn2 = _pick_n2_tile(n2)
    nt = n2 // tn2

    # Wrapper-side layout plumbing: cast bf16, tile N2, flatten (S, TN2) s-major.
    gk = grouped_cf.astype(jnp.bfloat16)
    gk = gk.reshape(b, cin, s, nt, tn2)
    gk = jnp.transpose(gk, (0, 3, 1, 2, 4)).reshape(b, nt, cin, s * tn2)

    # Fold BN scale into conv weights (bf16); keep bias in f32.
    wts, bvecs = [], []
    for w, sc, bi in zip(ws, scales, biases):
        wts.append((w * sc[None, :]).T.astype(jnp.bfloat16))    # (H_l, C_l)
        bvecs.append(bi.reshape(-1, 1).astype(jnp.float32))     # (H_l, 1)

    flat_params = []
    in_specs = [pl.BlockSpec((1, 1, cin, s * tn2), lambda i, j: (i, j, 0, 0))]
    for wt, bv in zip(wts, bvecs):
        flat_params += [wt, bv]
        in_specs += [pl.BlockSpec(wt.shape, lambda i, j: (0, 0)),
                     pl.BlockSpec(bv.shape, lambda i, j: (0, 0))]

    flops = 2 * b * n2 * s * sum(int(w.shape[0]) * int(w.shape[1]) for w in ws)
    bytes_accessed = (gk.size * 2
                      + sum(wt.size * 2 + bv.size * 4 for wt, bv in zip(wts, bvecs))
                      + b * cout * n2 * 4)
    cost = pl.CostEstimate(flops=flops, transcendentals=0,
                           bytes_accessed=bytes_accessed)

    new_features = pl.pallas_call(
        functools.partial(_mlp_maxpool_kernel, len(wts), s, tn2),
        out_shape=jax.ShapeDtypeStruct((b, cout, n2), jnp.float32),
        grid=(b, nt),
        in_specs=in_specs,
        out_specs=pl.BlockSpec((1, cout, tn2), lambda i, j: (i, 0, j)),
        compiler_params=pltpu.CompilerParams(
            dimension_semantics=("parallel", "parallel")),
        cost_estimate=cost,
    )(gk, *flat_params)

    return pos2, new_features


# ---------------------------------------------------------------------------
# Pure-JAX references (validation)
# ---------------------------------------------------------------------------
def reference_mlp_maxpool_matched(grouped_cf, wts, bvecs):
    """Same bf16-in / f32-accumulate arithmetic as the kernel."""
    x = grouped_cf.astype(jnp.bfloat16)
    n_layers = len(wts)
    for l, (wt, bv) in enumerate(zip(wts, bvecs)):
        y = jnp.einsum('hc,bcsn->bhsn',
                       wt.astype(jnp.float32), x.astype(jnp.float32),
                       precision=jax.lax.Precision.HIGHEST)
        y = jnp.maximum(y + bv.reshape(1, -1, 1, 1), 0.0)
        x = y.astype(jnp.bfloat16) if l + 1 < n_layers else y
    return jnp.max(x, axis=2)                                   # (B, Cout, N2)


def reference_mlp_maxpool_f32(grouped_cf, params):
    """Full-f32 reference of the module semantics (unfolded BN)."""
    ws, scales, biases = params
    x = grouped_cf
    for w, sc, bi in zip(ws, scales, biases):
        x = jnp.einsum('bcsn,ch->bhsn', x, w,
                       precision=jax.lax.Precision.HIGHEST)
        x = jnp.maximum(x * sc.reshape(1, -1, 1, 1) + bi.reshape(1, -1, 1, 1), 0.0)
    return jnp.max(x, axis=2)                                   # (B, Cout, N2)


# ---------------------------------------------------------------------------
# Deterministic parameter construction (synthetic, no checkpoint)
# ---------------------------------------------------------------------------
def make_params(key, mlp_channels):
    """Conv2d(1x1, bias=False) weights + BatchNorm2d (eval) folded to scale/bias."""
    ws, scales, biases = [], [], []
    eps = 1e-5
    for l in range(len(mlp_channels) - 1):
        cin, cout = mlp_channels[l], mlp_channels[l + 1]
        key, k1, k2, k3, k4, k5 = jax.random.split(key, 6)
        w = 0.1 * jax.random.normal(k1, (cin, cout), jnp.float32)
        gamma = 1.0 + 0.05 * jax.random.normal(k2, (cout,), jnp.float32)
        beta = 0.05 * jax.random.normal(k3, (cout,), jnp.float32)
        run_mean = 0.05 * jax.random.normal(k4, (cout,), jnp.float32)
        run_var = 1.0 + 0.1 * jnp.abs(jax.random.normal(k5, (cout,), jnp.float32))
        scale = gamma / jnp.sqrt(run_var + eps)
        bias = beta - run_mean * scale
        ws.append(w)
        scales.append(scale)
        biases.append(bias)
    return ws, scales, biases


if __name__ == "__main__":
    key = jax.random.PRNGKey(0)

    # Small shapes consistent with the module.
    B, N1, N2 = 2, 32, 16
    C1 = C2 = 4
    n_samples = 8
    radius = 0.5
    use_xyz = True
    mlp = [C1 + C2, 16, 16, 32]          # user-specified mlp
    if use_xyz:
        mlp = [mlp[0] + 3] + mlp[1:]     # module does mlp[0] += 3

    k_p1, k_p2, k_f1, k_f2, k_w = jax.random.split(key, 5)
    pos1 = jax.random.uniform(k_p1, (B, N1, 3), jnp.float32)
    pos2 = jax.random.uniform(k_p2, (B, N2, 3), jnp.float32)
    feats1 = jax.random.normal(k_f1, (B, C1, N1), jnp.float32)
    feats2 = jax.random.normal(k_f2, (B, C2, N2), jnp.float32)

    params = make_params(k_w, mlp)

    fwd = jax.jit(functools.partial(flow_embedding_forward,
                                    radius=radius, n_samples=n_samples))
    new_xyz, new_features = jax.block_until_ready(
        fwd(pos1, feats1, pos2, feats2, params))

    assert new_xyz.shape == (B, N2, 3)
    assert new_features.shape == (B, mlp[-1], N2)

    # Validate the Pallas hot path.
    idx = ball_query(pos1, pos2, radius, n_samples)
    grouped_cf = group_channels_first(pos1, pos2, feats1, feats2, idx)

    ws, scales, biases = params
    wts = [(w * sc[None, :]).T.astype(jnp.bfloat16) for w, sc in zip(ws, scales)]
    bvecs = [bi.reshape(-1, 1).astype(jnp.float32) for bi in biases]

    # 1) matched-precision reference (tight tolerance): catches kernel bugs.
    ref_match = reference_mlp_maxpool_matched(grouped_cf, wts, bvecs)
    assert jnp.allclose(new_features, ref_match, atol=1e-2, rtol=1e-2), \
        float(jnp.max(jnp.abs(new_features - ref_match)))

    # 2) full-f32 module reference (loose tolerance, bf16 quantization expected).
    ref_f32 = reference_mlp_maxpool_f32(grouped_cf, params)
    assert jnp.allclose(new_features, ref_f32, atol=1e-1, rtol=1e-1), \
        float(jnp.max(jnp.abs(new_features - ref_f32)))

    print("KERNEL_OK")
</pallas_src>

<mosaic_0001>
module attributes {stable_mosaic.version = 11 : i64} {
  func.func @_mlp_maxpool_kernel(%arg0: i32, %arg1: i32, %arg2: memref<1x1x11x128xbf16, #tpu.memory_space<vmem>>, %arg3: memref<16x11xbf16, #tpu.memory_space<vmem>>, %arg4: memref<16x1xf32, #tpu.memory_space<vmem>>, %arg5: memref<16x16xbf16, #tpu.memory_space<vmem>>, %arg6: memref<16x1xf32, #tpu.memory_space<vmem>>, %arg7: memref<32x16xbf16, #tpu.memory_space<vmem>>, %arg8: memref<32x1xf32, #tpu.memory_space<vmem>>, %arg9: memref<1x32x16xf32, #tpu.memory_space<vmem>>) attributes {dimension_semantics = [#tpu.dimension_semantics<parallel>, #tpu.dimension_semantics<parallel>], iteration_bounds = array<i64: 2, 1>, scalar_prefetch = 0 : i64, scratch_operands = 0 : i64, tpu.core_type = #tpu.core_type<tc>, window_params = [{transform_indices = @transform_0, window_bounds = array<i64: 1, 1, 11, 128>}, {pipeline_mode = #tpu.pipeline_mode<synchronous>, transform_indices = @transform_1, window_bounds = array<i64: 16, 11>}, {pipeline_mode = #tpu.pipeline_mode<synchronous>, transform_indices = @transform_2, window_bounds = array<i64: 16, 1>}, {pipeline_mode = #tpu.pipeline_mode<synchronous>, transform_indices = @transform_3, window_bounds = array<i64: 16, 16>}, {pipeline_mode = #tpu.pipeline_mode<synchronous>, transform_indices = @transform_4, window_bounds = array<i64: 16, 1>}, {pipeline_mode = #tpu.pipeline_mode<synchronous>, transform_indices = @transform_5, window_bounds = array<i64: 32, 16>}, {pipeline_mode = #tpu.pipeline_mode<synchronous>, transform_indices = @transform_6, window_bounds = array<i64: 32, 1>}, {transform_indices = @transform_7, window_bounds = array<i64: 1, 32, 16>}]} {
    %c0 = arith.constant 0 : index
    %c0_0 = arith.constant 0 : index
    %c0_1 = arith.constant 0 : index
    %c0_2 = arith.constant 0 : index
    %0 = vector.load %arg2[%c0, %c0_0, %c0_1, %c0_2] : memref<1x1x11x128xbf16, #tpu.memory_space<vmem>>, vector<1x1x11x128xbf16>
    %1 = vector.shape_cast %0 : vector<1x1x11x128xbf16> to vector<11x128xbf16>
    %c0_3 = arith.constant 0 : index
    %c0_4 = arith.constant 0 : index
    %2 = vector.load %arg3[%c0_3, %c0_4] : memref<16x11xbf16, #tpu.memory_space<vmem>>, vector<16x11xbf16>
    %c0_5 = arith.constant 0 : index
    %c0_6 = arith.constant 0 : index
    %3 = vector.load %arg4[%c0_5, %c0_6] : memref<16x1xf32, #tpu.memory_space<vmem>>, vector<16x1xf32>
    %cst = arith.constant dense<0.000000e+00> : vector<16x128xf32>
    %4 = tpu.matmul %2, %1, %cst {dimension_numbers = #tpu.dot_dimension_numbers<[1], [0], [0], [1], [0, 0, 1, 1], [], []>} : vector<16x11xbf16>, vector<11x128xbf16>, vector<16x128xf32> -> vector<16x128xf32>
    %5 = vector.broadcast %3 : vector<16x1xf32> to vector<16x128xf32>
    %6 = arith.addf %4, %5 : vector<16x128xf32>
    %cst_7 = arith.constant 0.000000e+00 : f32
    %7 = vector.broadcast %cst_7 : f32 to vector<16x128xf32>
    %8 = arith.maximumf %6, %7 : vector<16x128xf32>
    %9 = arith.truncf %8 : vector<16x128xf32> to vector<16x128xbf16>
    %c0_8 = arith.constant 0 : index
    %c0_9 = arith.constant 0 : index
    %10 = vector.load %arg5[%c0_8, %c0_9] : memref<16x16xbf16, #tpu.memory_space<vmem>>, vector<16x16xbf16>
    %c0_10 = arith.constant 0 : index
    %c0_11 = arith.constant 0 : index
    %11 = vector.load %arg6[%c0_10, %c0_11] : memref<16x1xf32, #tpu.memory_space<vmem>>, vector<16x1xf32>
    %cst_12 = arith.constant dense<0.000000e+00> : vector<16x128xf32>
    %12 = tpu.matmul %10, %9, %cst_12 {dimension_numbers = #tpu.dot_dimension_numbers<[1], [0], [0], [1], [0, 0, 1, 1], [], []>} : vector<16x16xbf16>, vector<16x128xbf16>, vector<16x128xf32> -> vector<16x128xf32>
    %13 = vector.broadcast %11 : vector<16x1xf32> to vector<16x128xf32>
    %14 = arith.addf %12, %13 : vector<16x128xf32>
    %cst_13 = arith.constant 0.000000e+00 : f32
    %15 = vector.broadcast %cst_13 : f32 to vector<16x128xf32>
    %16 = arith.maximumf %14, %15 : vector<16x128xf32>
    %17 = arith.truncf %16 : vector<16x128xf32> to vector<16x128xbf16>
    %c0_14 = arith.constant 0 : index
    %c0_15 = arith.constant 0 : index
    %18 = vector.load %arg7[%c0_14, %c0_15] : memref<32x16xbf16, #tpu.memory_space<vmem>>, vector<32x16xbf16>
    %c0_16 = arith.constant 0 : index
    %c0_17 = arith.constant 0 : index
    %19 = vector.load %arg8[%c0_16, %c0_17] : memref<32x1xf32, #tpu.memory_space<vmem>>, vector<32x1xf32>
    %cst_18 = arith.constant dense<0.000000e+00> : vector<32x128xf32>
    %20 = tpu.matmul %18, %17, %cst_18 {dimension_numbers = #tpu.dot_dimension_numbers<[1], [0], [0], [1], [0, 0, 1, 1], [], []>} : vector<32x16xbf16>, vector<16x128xbf16>, vector<32x128xf32> -> vector<32x128xf32>
    %21 = vector.broadcast %19 : vector<32x1xf32> to vector<32x128xf32>
    %22 = arith.addf %20, %21 : vector<32x128xf32>
    %cst_19 = arith.constant 0.000000e+00 : f32
    %23 = vector.broadcast %cst_19 : f32 to vector<32x128xf32>
    %24 = arith.maximumf %22, %23 : vector<32x128xf32>
    %25 = vector.extract_strided_slice %24 {offsets = [0, 0], sizes = [32, 16], strides = [1, 1]} : vector<32x128xf32> to vector<32x16xf32>
    %26 = vector.extract_strided_slice %24 {offsets = [0, 16], sizes = [32, 16], strides = [1, 1]} : vector<32x128xf32> to vector<32x16xf32>
    %27 = arith.maximumf %25, %26 : vector<32x16xf32>
    %28 = vector.extract_strided_slice %24 {offsets = [0, 32], sizes = [32, 16], strides = [1, 1]} : vector<32x128xf32> to vector<32x16xf32>
    %29 = arith.maximumf %27, %28 : vector<32x16xf32>
    %30 = vector.extract_strided_slice %24 {offsets = [0, 48], sizes = [32, 16], strides = [1, 1]} : vector<32x128xf32> to vector<32x16xf32>
    %31 = arith.maximumf %29, %30 : vector<32x16xf32>
    %32 = vector.extract_strided_slice %24 {offsets = [0, 64], sizes = [32, 16], strides = [1, 1]} : vector<32x128xf32> to vector<32x16xf32>
    %33 = arith.maximumf %31, %32 : vector<32x16xf32>
    %34 = vector.extract_strided_slice %24 {offsets = [0, 80], sizes = [32, 16], strides = [1, 1]} : vector<32x128xf32> to vector<32x16xf32>
    %35 = arith.maximumf %33, %34 : vector<32x16xf32>
    %36 = vector.extract_strided_slice %24 {offsets = [0, 96], sizes = [32, 16], strides = [1, 1]} : vector<32x128xf32> to vector<32x16xf32>
    %37 = arith.maximumf %35, %36 : vector<32x16xf32>
    %38 = vector.extract_strided_slice %24 {offsets = [0, 112], sizes = [32, 16], strides = [1, 1]} : vector<32x128xf32> to vector<32x16xf32>
    %39 = arith.maximumf %37, %38 : vector<32x16xf32>
    %c0_20 = arith.constant 0 : index
    %c0_21 = arith.constant 0 : index
    %c0_22 = arith.constant 0 : index
    %40 = vector.load %arg9[%c0_20, %c0_21, %c0_22] : memref<1x32x16xf32, #tpu.memory_space<vmem>>, vector<1x32x16xf32>
    %41 = vector.shape_cast %40 : vector<1x32x16xf32> to vector<32x16xf32>
    %42 = vector.shape_cast %39 : vector<32x16xf32> to vector<1x32x16xf32>
    tpu.vector_store %arg9[%c0_20, %c0_21, %c0_22], %42 {strides = array<i32>} : memref<1x32x16xf32, #tpu.memory_space<vmem>>, vector<1x32x16xf32>,
    return
  }
  func.func @transform_0(%arg0: i32, %arg1: i32) -> (i32, i32, i32, i32) {
    %c0_i32 = arith.constant 0 : i32
    %c0_i32_0 = arith.constant 0 : i32
    %c0_i32_1 = arith.constant 0 : i32
    return %arg0, %arg1, %c0_i32, %c0_i32_0 : i32, i32, i32, i32
  }
  func.func @transform_1(%arg0: i32, %arg1: i32) -> (i32, i32) {
    %c0_i32 = arith.constant 0 : i32
    %c0_i32_0 = arith.constant 0 : i32
    %c0_i32_1 = arith.constant 0 : i32
    return %c0_i32, %c0_i32_0 : i32, i32
  }
  func.func @transform_2(%arg0: i32, %arg1: i32) -> (i32, i32) {
    %c0_i32 = arith.constant 0 : i32
    %c0_i32_0 = arith.constant 0 : i32
    %c0_i32_1 = arith.constant 0 : i32
    return %c0_i32, %c0_i32_0 : i32, i32
  }
  func.func @transform_3(%arg0: i32, %arg1: i32) -> (i32, i32) {
    %c0_i32 = arith.constant 0 : i32
    %c0_i32_0 = arith.constant 0 : i32
    %c0_i32_1 = arith.constant 0 : i32
    return %c0_i32, %c0_i32_0 : i32, i32
  }
  func.func @transform_4(%arg0: i32, %arg1: i32) -> (i32, i32) {
    %c0_i32 = arith.constant 0 : i32
    %c0_i32_0 = arith.constant 0 : i32
    %c0_i32_1 = arith.constant 0 : i32
    return %c0_i32, %c0_i32_0 : i32, i32
  }
  func.func @transform_5(%arg0: i32, %arg1: i32) -> (i32, i32) {
    %c0_i32 = arith.constant 0 : i32
    %c0_i32_0 = arith.constant 0 : i32
    %c0_i32_1 = arith.constant 0 : i32
    return %c0_i32, %c0_i32_0 : i32, i32
  }
  func.func @transform_6(%arg0: i32, %arg1: i32) -> (i32, i32) {
    %c0_i32 = arith.constant 0 : i32
    %c0_i32_0 = arith.constant 0 : i32
    %c0_i32_1 = arith.constant 0 : i32
    return %c0_i32, %c0_i32_0 : i32, i32
  }
  func.func @transform_7(%arg0: i32, %arg1: i32) -> (i32, i32, i32) {
    %c0_i32 = arith.constant 0 : i32
    %c0_i32_0 = arith.constant 0 : i32
    return %arg0, %c0_i32, %arg1 : i32, i32, i32
  }
}

</mosaic_0001>

<llo_original>
// kernel: flow_embedding_forward.1
$region0: #{flow_embedding_forward.1}
  #allocation0 [shape = 'u32[]', space=smem, size = 0x4, offset = 0x4, fixed_abs, tag = 'smem constant byte address 0x4 - core index']
  #allocation1 [shape = 'u32[144,128]{1,0:T(1,128)}', space=vmem, size = 0x12000, scoped, tag = 'internal scratch']
  %s0 = inlined_call_operand.vmem [shape: bf16[2,1,11,128], index: 0, kind: input, shape index: {}]
  %s1 = inlined_call_operand.vmem [shape: bf16[16,11], index: 1, kind: input, shape index: {}]
  %s2 = inlined_call_operand.vmem [shape: f32[16,1], index: 2, kind: input, shape index: {}]
  %s3 = inlined_call_operand.vmem [shape: bf16[16,16], index: 3, kind: input, shape index: {}]
  %s4 = inlined_call_operand.vmem [shape: f32[16,1], index: 4, kind: input, shape index: {}]
  %s5 = inlined_call_operand.vmem [shape: bf16[32,16], index: 5, kind: input, shape index: {}]
  %s6 = inlined_call_operand.vmem [shape: f32[32,1], index: 6, kind: input, shape index: {}]
  %s7 = inlined_call_operand.vmem [shape: f32[2,32,16], index: 7, kind: output, shape index: {}]
  %s8 = sld [smem:[#allocation0]]
  $region61: #{flow_embedding_forward.1} parent=0
    _
  %s10 = ssub.s32 1, %s8
  %s11 = scalar_select 0, %s10, %s8
  loop: start=0, step=1, limit=4
  $region2: #{flow_embedding_forward.1} parent=0 // loop_pre_header
    _
  $region3: #{flow_embedding_forward.1} parent=0 // loop_header
    %s13 = sphi 0, %s17
    %p14 = scmp.ge.s32.totalorder %s13, 4
    %s20 = sphi 0, %s32
    %s21 = sphi 0, %s28
    %s22 = sphi 0, %s20
    %s23 = sphi 0, %s21
    %s24 = sphi 0, %s22
    %s25 = sphi 0, %s23
    %s37 = sphi 0, %s39
    %s40 = sphi 0, %s37
    %s41 = sphi 0, %s40
    %s57 = sphi 0, %s41
    %s61 = sphi 0, %s61
    %s63 = sphi 0, %s61
    %s64 = sphi 0, %s63
    %s78 = sphi 0, %s64
    %s82 = sphi 0, %s82
    %s84 = sphi 0, %s82
    %s85 = sphi 0, %s84
    %s99 = sphi 0, %s85
    %s103 = sphi 0, %s103
    %s105 = sphi 0, %s103
    %s106 = sphi 0, %s105
    %s120 = sphi 0, %s106
    %s124 = sphi 0, %s124
    %s126 = sphi 0, %s124
    %s127 = sphi 0, %s126
    %s141 = sphi 0, %s127
    %s145 = sphi 0, %s145
    %s147 = sphi 0, %s145
    %s148 = sphi 0, %s147
    %s162 = sphi 0, %s148
    %s166 = sphi 0, %s166
    %s168 = sphi 0, %s166
    %s169 = sphi 0, %s168
    %s183 = sphi 0, %s169
    %s191 = sphi 0, %s193
    %s194 = sphi 0, %s191
    %s195 = sphi 0, %s194
    %s211 = sphi 0, %s195
  $region4: #{flow_embedding_forward.1} parent=0 // loop_header_branch
    %16 = sbr.rel (%p14) target = $region8
  $region5: #{flow_embedding_forward.1} parent=0 // loop_body
    %s18 = ssub.s32 %s13, 1
    %s19 = ssub.s32 %s13, 2
    %s26 = sadd.s32 1, %s21
    %p27 = scmp.ge.s32.totalorder %s26, 1
    %s28 = scalar_select %p27, 0, %s26
    %s29 = sadd.s32 1, %s20
    %s30 = scalar_select %p27, %s29, %s20
    %p31 = scmp.ge.s32.totalorder %s30, 2
    %s32 = scalar_select %p31, 0, %s30
    %s33 = ssub.s32 %s20, %s32
    %s34 = ssub.s32 %s21, %s28
    %s35 = sor.u32 %s33, %s34
    %p36 = scmp.eq.s32.totalorder %s35, 0
    %s38 = sadd.s32 %s37, 1
    %s39 = scalar_select %p36, %s37, %s38
    %p42 = pneg %p36
    %p43 = scmp.eq.s32.totalorder %s13, 1
    %p44 = por %p42, %p43
    %p45 = scmp.ne.s32.totalorder %s37, %s40
    %p46 = scmp.eq.s32.totalorder %s13, 0
    %p47 = por %p45, %p46
    %p48 = scmp.ne.s32.totalorder %s37, %s40
    %p49 = scmp.eq.s32.totalorder %s18, 1
    %p50 = por %p48, %p49
    %p51 = scmp.ne.s32.totalorder %s40, %s41
    %p52 = scmp.eq.s32.totalorder %s18, 0
    %p53 = por %p51, %p52
    %p54 = scmp.ne.s32.totalorder %s40, %s41
    %p55 = scmp.eq.s32.totalorder %s19, 1
    %p56 = por %p54, %p55
    %p58 = scmp.ne.s32.totalorder %s41, %s57
    %p59 = scmp.eq.s32.totalorder %s19, 0
    %p60 = por %p58, %p59
    %s62 = sadd.s32 %s61, 1
    %p65 = scmp.eq.s32.totalorder %s13, 1
    %p66 = scmp.ne.s32.totalorder %s61, %s63
    %p67 = scmp.eq.s32.totalorder %s13, 0
    %p68 = por %p66, %p67
    %p69 = scmp.ne.s32.totalorder %s61, %s63
    %p70 = scmp.eq.s32.totalorder %s18, 1
    %p71 = por %p69, %p70
    %p72 = scmp.ne.s32.totalorder %s63, %s64
    %p73 = scmp.eq.s32.totalorder %s18, 0
    %p74 = por %p72, %p73
    %p75 = scmp.ne.s32.totalorder %s63, %s64
    %p76 = scmp.eq.s32.totalorder %s19, 1
    %p77 = por %p75, %p76
    %p79 = scmp.ne.s32.totalorder %s64, %s78
    %p80 = scmp.eq.s32.totalorder %s19, 0
    %p81 = por %p79, %p80
    %s83 = sadd.s32 %s82, 1
    %p86 = scmp.eq.s32.totalorder %s13, 1
    %p87 = scmp.ne.s32.totalorder %s82, %s84
    %p88 = scmp.eq.s32.totalorder %s13, 0
    %p89 = por %p87, %p88
    %p90 = scmp.ne.s32.totalorder %s82, %s84
    %p91 = scmp.eq.s32.totalorder %s18, 1
    %p92 = por %p90, %p91
    %p93 = scmp.ne.s32.totalorder %s84, %s85
    %p94 = scmp.eq.s32.totalorder %s18, 0
    %p95 = por %p93, %p94
    %p96 = scmp.ne.s32.totalorder %s84, %s85
    %p97 = scmp.eq.s32.totalorder %s19, 1
    %p98 = por %p96, %p97
    %p100 = scmp.ne.s32.totalorder %s85, %s99
    %p101 = scmp.eq.s32.totalorder %s19, 0
    %p102 = por %p100, %p101
    %s104 = sadd.s32 %s103, 1
    %p107 = scmp.eq.s32.totalorder %s13, 1
    %p108 = scmp.ne.s32.totalorder %s103, %s105
    %p109 = scmp.eq.s32.totalorder %s13, 0
    %p110 = por %p108, %p109
    %p111 = scmp.ne.s32.totalorder %s103, %s105
    %p112 = scmp.eq.s32.totalorder %s18, 1
    %p113 = por %p111, %p112
    %p114 = scmp.ne.s32.totalorder %s105, %s106
    %p115 = scmp.eq.s32.totalorder %s18, 0
    %p116 = por %p114, %p115
    %p117 = scmp.ne.s32.totalorder %s105, %s106
    %p118 = scmp.eq.s32.totalorder %s19, 1
    %p119 = por %p117, %p118
    %p121 = scmp.ne.s32.totalorder %s106, %s120
    %p122 = scmp.eq.s32.totalorder %s19, 0
    %p123 = por %p121, %p122
    %s125 = sadd.s32 %s124, 1
    %p128 = scmp.eq.s32.totalorder %s13, 1
    %p129 = scmp.ne.s32.totalorder %s124, %s126
    %p130 = scmp.eq.s32.totalorder %s13, 0
    %p131 = por %p129, %p130
    %p132 = scmp.ne.s32.totalorder %s124, %s126
    %p133 = scmp.eq.s32.totalorder %s18, 1
    %p134 = por %p132, %p133
    %p135 = scmp.ne.s32.totalorder %s126, %s127
    %p136 = scmp.eq.s32.totalorder %s18, 0
    %p137 = por %p135, %p136
    %p138 = scmp.ne.s32.totalorder %s126, %s127
    %p139 = scmp.eq.s32.totalorder %s19, 1
    %p140 = por %p138, %p139
    %p142 = scmp.ne.s32.totalorder %s127, %s141
    %p143 = scmp.eq.s32.totalorder %s19, 0
    %p144 = por %p142, %p143
    %s146 = sadd.s32 %s145, 1
    %p149 = scmp.eq.s32.totalorder %s13, 1
    %p150 = scmp.ne.s32.totalorder %s145, %s147
    %p151 = scmp.eq.s32.totalorder %s13, 0
    %p152 = por %p150, %p151
    %p153 = scmp.ne.s32.totalorder %s145, %s147
    %p154 = scmp.eq.s32.totalorder %s18, 1
    %p155 = por %p153, %p154
    %p156 = scmp.ne.s32.totalorder %s147, %s148
    %p157 = scmp.eq.s32.totalorder %s18, 0
    %p158 = por %p156, %p157
    %p159 = scmp.ne.s32.totalorder %s147, %s148
    %p160 = scmp.eq.s32.totalorder %s19, 1
    %p161 = por %p159, %p160
    %p163 = scmp.ne.s32.totalorder %s148, %s162
    %p164 = scmp.eq.s32.totalorder %s19, 0
    %p165 = por %p163, %p164
    %s167 = sadd.s32 %s166, 1
    %p170 = scmp.eq.s32.totalorder %s13, 1
    %p171 = scmp.ne.s32.totalorder %s166, %s168
    %p172 = scmp.eq.s32.totalorder %s13, 0
    %p173 = por %p171, %p172
    %p174 = scmp.ne.s32.totalorder %s166, %s168
    %p175 = scmp.eq.s32.totalorder %s18, 1
    %p176 = por %p174, %p175
    %p177 = scmp.ne.s32.totalorder %s168, %s169
    %p178 = scmp.eq.s32.totalorder %s18, 0
    %p179 = por %p177, %p178
    %p180 = scmp.ne.s32.totalorder %s168, %s169
    %p181 = scmp.eq.s32.totalorder %s19, 1
    %p182 = por %p180, %p181
    %p184 = scmp.ne.s32.totalorder %s169, %s183
    %p185 = scmp.eq.s32.totalorder %s19, 0
    %p186 = por %p184, %p185
    %s187 = ssub.s32 %s20, %s32
    %s188 = ssub.s32 %s21, %s28
    %s189 = sor.u32 %s187, %s188
    %p190 = scmp.eq.s32.totalorder %s189, 0
    %s192 = sadd.s32 %s191, 1
    %s193 = scalar_select %p190, %s191, %s192
    %p196 = pneg %p190
    %p197 = scmp.eq.s32.totalorder %s13, 1
    %p198 = por %p196, %p197
    %p199 = scmp.ne.s32.totalorder %s191, %s194
    %p200 = scmp.eq.s32.totalorder %s13, 0
    %p201 = por %p199, %p200
    %p202 = scmp.ne.s32.totalorder %s191, %s194
    %p203 = scmp.eq.s32.totalorder %s18, 1
    %p204 = por %p202, %p203
    %p205 = scmp.ne.s32.totalorder %s194, %s195
    %p206 = scmp.eq.s32.totalorder %s18, 0
    %p207 = por %p205, %p206
    %p208 = scmp.ne.s32.totalorder %s194, %s195
    %p209 = scmp.eq.s32.totalorder %s19, 1
    %p210 = por %p208, %p209
    %p212 = scmp.ne.s32.totalorder %s195, %s211
    %p213 = scmp.eq.s32.totalorder %s19, 0
    %p214 = por %p212, %p213
    %p215 = scmp.le.s32.totalorder 1, %s13
    %p216 = scmp.lt.s32.totalorder %s13, 3
    %p217 = pnand %p215, %p216
    %p218 = pneg %p217
    // Predicated region
    $region9: #{flow_embedding_forward.1} parent=5 // pred_check
      _
    $region10: #{flow_embedding_forward.1} parent=5 // pred_check_branch
      %220 = sbr.rel (%p217) target = $region12
    $region11: #{flow_embedding_forward.1} parent=5 // pred_region
      %s221 = ssub.s32 %s13, 1
      // Predicated region
      $region13: #{flow_embedding_forward.1} parent=11 // pred_check
        %p222 = pneg %p74
      $region14: #{flow_embedding_forward.1} parent=11 // pred_check_branch
        %224 = sbr.rel (%p222) target = $region16
      $region15: #{flow_embedding_forward.1} parent=11 // pred_region
        _
      $region16: #{flow_embedding_forward.1} parent=11 // pred_fallthru
        _
      // Predicated region
      $region17: #{flow_embedding_forward.1} parent=11 // pred_check
        %p225 = pneg %p95
      $region18: #{flow_embedding_forward.1} parent=11 // pred_check_branch
        %227 = sbr.rel (%p225) target = $region20
      $region19: #{flow_embedding_forward.1} parent=11 // pred_region
        _
      $region20: #{flow_embedding_forward.1} parent=11 // pred_fallthru
        _
      // Predicated region
      $region21: #{flow_embedding_forward.1} parent=11 // pred_check
        %p228 = pneg %p116
      $region22: #{flow_embedding_forward.1} parent=11 // pred_check_branch
        %230 = sbr.rel (%p228) target = $region24
      $region23: #{flow_embedding_forward.1} parent=11 // pred_region
        _
      $region24: #{flow_embedding_forward.1} parent=11 // pred_fallthru
        _
      // Predicated region
      $region25: #{flow_embedding_forward.1} parent=11 // pred_check
        %p231 = pneg %p137
      $region26: #{flow_embedding_forward.1} parent=11 // pred_check_branch
        %233 = sbr.rel (%p231) target = $region28
      $region27: #{flow_embedding_forward.1} parent=11 // pred_region
        _
      $region28: #{flow_embedding_forward.1} parent=11 // pred_fallthru
        _
      // Predicated region
      $region29: #{flow_embedding_forward.1} parent=11 // pred_check
        %p234 = pneg %p158
      $region30: #{flow_embedding_forward.1} parent=11 // pred_check_branch
        %236 = sbr.rel (%p234) target = $region32
      $region31: #{flow_embedding_forward.1} parent=11 // pred_region
        _
      $region32: #{flow_embedding_forward.1} parent=11 // pred_fallthru
        _
      // Predicated region
      $region33: #{flow_embedding_forward.1} parent=11 // pred_check
        %p237 = pneg %p179
      $region34: #{flow_embedding_forward.1} parent=11 // pred_check_branch
        %239 = sbr.rel (%p237) target = $region36
      $region35: #{flow_embedding_forward.1} parent=11 // pred_region
        _
      $region36: #{flow_embedding_forward.1} parent=11 // pred_fallthru
        _
    $region12: #{flow_embedding_forward.1} parent=5 // pred_fallthru
      _
    %p240 = scmp.lt.s32.totalorder %s13, 2
    // Predicated region
    $region37: #{flow_embedding_forward.1} parent=5 // pred_check
      %p241 = pneg %p240
    $region38: #{flow_embedding_forward.1} parent=5 // pred_check_branch
      %243 = sbr.rel (%p241) target = $region40
    $region39: #{flow_embedding_forward.1} parent=5 // pred_region
      // Predicated region
      $region41: #{flow_embedding_forward.1} parent=39 // pred_check
        %p244 = pneg %p47
      $region42: #{flow_embedding_forward.1} parent=39 // pred_check_branch
        %246 = sbr.rel (%p244) target = $region44
      $region43: #{flow_embedding_forward.1} parent=39 // pred_region
        %p247 = scmp.lt.s32.totalorder %s20, 1
        %s248 = scalar_select %p247, %s20, 1
        %p249 = scmp.lt.s32.totalorder %s21, 0
        %s250 = scalar_select %p249, %s21, 0
        %s251 = smul.addr %s250, 2
        %s252 = smul.addr %s248, 2
        %s253 = sadd.s32 %s251, %s252
        %s254 = smul.addr %s253, 4
        %s255 = scalar_lea.vmem %s0, %s254
      $region44: #{flow_embedding_forward.1} parent=39 // pred_fallthru
        _
    $region40: #{flow_embedding_forward.1} parent=5 // pred_fallthru
      _
    %p256 = scmp.le.s32.totalorder 1, %s13
    %p257 = scmp.lt.s32.totalorder %s13, 3
    %p258 = pnand %p256, %p257
    %p259 = pneg %p258
    // Predicated region
    $region45: #{flow_embedding_forward.1} parent=5 // pred_check
      _
    $region46: #{flow_embedding_forward.1} parent=5 // pred_check_branch
      %261 = sbr.rel (%p258) target = $region48
    $region47: #{flow_embedding_forward.1} parent=5 // pred_region
      %s262 = ssub.s32 %s13, 1
      %p263 = scmp.lt.s32.totalorder %s22, 1
      %s264 = scalar_select %p263, %s22, 1
      %p265 = scmp.lt.s32.totalorder %s23, 0
      %s266 = scalar_select %p265, %s23, 0
      %s267 = smul.addr %s266, 2
      %s268 = smul.addr %s264, 2
      %s269 = sadd.s32 %s267, %s268
      %s270 = smul.addr %s269, 4
      %s271 = scalar_lea.vmem %s0, %s270
      %p272 = pneg %p53
      %p273 = pneg %p50
      %p274 = pneg %p74
      %p275 = pneg %p71
      %p276 = pneg %p95
      %p277 = pneg %p92
      %p278 = pneg %p116
      %p279 = pneg %p113
      %p280 = pneg %p137
      %p281 = pneg %p134
      %p282 = pneg %p158
      %p283 = pneg %p155
      %p284 = pneg %p179
      %p285 = pneg %p176
      %p286 = pneg %p207
      %p287 = pneg %p204
      %p288 = scmp.lt.s32.totalorder %s22, 1
      %s289 = scalar_select %p288, %s22, 1
      %p290 = scmp.lt.s32.totalorder %s23, 0
      %s291 = scalar_select %p290, %s23, 0
      %s292 = smul.addr %s289, 4
      %s293 = sadd.s32 %s291, %s292
      %s294 = smul.addr %s293, 8
      %s295 = scalar_lea.vmem %s7, %s294
      %p296 = scmp.lt.s32.totalorder %s22, 1
      %s297 = scalar_select %p296, %s22, 1
      %p298 = scmp.lt.s32.totalorder %s23, 0
      %s299 = scalar_select %p298, %s23, 0
      %s300 = smul.addr %s299, 2
      %s301 = smul.addr %s297, 2
      %s302 = sadd.s32 %s300, %s301
      %s303 = smul.addr %s302, 4
      %s304 = scalar_lea.vmem %s0, %s303
      %p305 = scmp.lt.s32.totalorder %s22, 1
      %s306 = scalar_select %p305, %s22, 1
      %p307 = scmp.lt.s32.totalorder %s23, 0
      %s308 = scalar_select %p307, %s23, 0
      %s309 = smul.addr %s306, 4
      %s310 = sadd.s32 %s308, %s309
      %s311 = smul.addr %s310, 8
      %s312 = scalar_lea.vmem %s7, %s311
      %v314 = vld [vmem:[%s304] sm:$0xf]
      %v315 = vld [vmem:[%s304 + $0x4] sm:$0x3]
      %v316 = vld [vmem:[%s1] sm:$0xf]
      %v317 = vld [vmem:[%s1 + $0x4] sm:$0xf]
      %v318 = vld [vmem:[%s2] sm:$0xff]
      %v319 = vld [vmem:[%s2 + $0x8] sm:$0xff]
      %321 = vset.pattern.permute.xlu0 0
      %322 = vperm.xlu0 %321, %v318
      %v323 = vpop.permute.xlu0 %322
      %326 = vset.pattern.permute.xlu0 0
      %327 = vperm.xlu0 %326, %v319
      %v328 = vpop.permute.xlu0 %327
      %v332 = vunpack.c.l.b16 %v316
      %v333 = vunpack.c.l.b16 %v317
      %v334 = vpack.c.b16 %v333, %v332
      %v337 = vunpack.c.l.b16 %v314
      %v338 = vunpack.c.l.b16 %v315
      %v339 = vpack.c.b16 %v338, %v337
      %vm340 = vcmask 89088
      %v342 = vsel %vm340, %v334, 0
      %vm344 = vcmask 1044480
      %vm345 = vcmask 1045504
      %v346 = vsel %vm344, 4294967295, 65535
      %v347 = vsel %vm345, %v346, 0
      %v349 = vand.u32 %v339, %v347
      %351 = vmatprep.subr.bf16.mxu0 0
      %352 = vmatpush1.bf16.msra.mxu0 %v349
      %353 = vmatprep.subr.bf16.mxu0 0
      %354 = vmatpush1.bf16.msra.mxu0 0
      %355 = vmatprep.subr.bf16.mxu0 0
      %356 = vmatpush1.bf16.msra.mxu0 0
      %357 = vmatprep.subr.bf16.mxu0 0
      %358 = vmatpush1.bf16.msra.mxu0 0
      %359 = vmatprep.subr.bf16.mxu0 0
      %360 = vmatpush1.bf16.msra.mxu0 0
      %361 = vmatprep.subr.bf16.mxu0 0
      %362 = vmatpush1.bf16.msra.mxu0 0
      %363 = vmatprep.subr.bf16.mxu0 0
      %364 = vmatpush1.bf16.msra.mxu0 0
      %365 = vmatprep.subr.bf16.mxu0 0
      %366 = vmatpush1.bf16.msra.mxu0 0
      %367 = vmatprep.subr.bf16.mxu0 0
      %368 = vmatpush1.bf16.msra.mxu0 0
      %369 = vmatprep.subr.bf16.mxu0 0
      %370 = vmatpush1.bf16.msra.mxu0 0
      %371 = vmatprep.subr.bf16.mxu0 0
      %372 = vmatpush1.bf16.msra.mxu0 0
      %373 = vmatprep.subr.bf16.mxu0 0
      %374 = vmatpush1.bf16.msra.mxu0 0
      %375 = vmatprep.subr.bf16.mxu0 0
      %376 = vmatpush1.bf16.msra.mxu0 0
      %377 = vmatprep.subr.bf16.mxu0 0
      %378 = vmatpush1.bf16.msra.mxu0 0
      %379 = vmatprep.subr.bf16.mxu0 0
      %380 = vmatpush1.bf16.msra.mxu0 0
      %381 = vmatprep.subr.bf16.mxu0 0
      %382 = vmatpush1.bf16.msra.mxu0 0
      %383 = vmatprep.mubr.bf16.mxu0 0
      %384 = vmatmul.mubr.bf16.gmra.mrb[0].mxu0 %v342
      %v385 = vpop.f32.mrb[0].mxu0
      %v386 = vadd.f32 %v323, %v385
      %v387 = vpop.f32.mrb[0].mxu0
      %v388 = vpop.f32.mrb[0].mxu0
      %v389 = vadd.f32 %v328, %v388
      %v390 = vpop.f32.mrb[0].mxu0
      %391 = vdwg.mxu0
      %v392 = vmax.f32 %v386, 0.0
      %v393 = vmax.f32 %v389, 0.0
      %v394 = vpack.c.bf16 %v393, %v392
      %v395 = vld [vmem:[%s3] sm:$0xf]
      %v396 = vld [vmem:[%s3 + $0x4] sm:$0xf]
      %v397 = vld [vmem:[%s4] sm:$0xff]
      %v398 = vld [vmem:[%s4 + $0x8] sm:$0xff]
      %400 = vset.pattern.permute.xlu0 0
      %401 = vperm.xlu0 %400, %v397
      %v402 = vpop.permute.xlu0 %401
      %405 = vset.pattern.permute.xlu0 0
      %406 = vperm.xlu0 %405, %v398
      %v407 = vpop.permute.xlu0 %406
      %v411 = vunpack.c.l.b16 %v395
      %v412 = vunpack.c.l.b16 %v396
      %v413 = vpack.c.b16 %v412, %v411
      %vm414 = vcmask 130048
      %v416 = vsel %vm414, %v413, 0
      %418 = vmatprep.subr.bf16.mxu0 0
      %419 = vmatpush1.bf16.msra.mxu0 %v394
      %420 = vmatprep.subr.bf16.mxu0 0
      %421 = vmatpush1.bf16.msra.mxu0 0
      %422 = vmatprep.subr.bf16.mxu0 0
      %423 = vmatpush1.bf16.msra.mxu0 0
      %424 = vmatprep.subr.bf16.mxu0 0
      %425 = vmatpush1.bf16.msra.mxu0 0
      %426 = vmatprep.subr.bf16.mxu0 0
      %427 = vmatpush1.bf16.msra.mxu0 0
      %428 = vmatprep.subr.bf16.mxu0 0
      %429 = vmatpush1.bf16.msra.mxu0 0
      %430 = vmatprep.subr.bf16.mxu0 0
      %431 = vmatpush1.bf16.msra.mxu0 0
      %432 = vmatprep.subr.bf16.mxu0 0
      %433 = vmatpush1.bf16.msra.mxu0 0
      %434 = vmatprep.subr.bf16.mxu0 0
      %435 = vmatpush1.bf16.msra.mxu0 0
      %436 = vmatprep.subr.bf16.mxu0 0
      %437 = vmatpush1.bf16.msra.mxu0 0
      %438 = vmatprep.subr.bf16.mxu0 0
      %439 = vmatpush1.bf16.msra.mxu0 0
      %440 = vmatprep.subr.bf16.mxu0 0
      %441 = vmatpush1.bf16.msra.mxu0 0
      %442 = vmatprep.subr.bf16.mxu0 0
      %443 = vmatpush1.bf16.msra.mxu0 0
      %444 = vmatprep.subr.bf16.mxu0 0
      %445 = vmatpush1.bf16.msra.mxu0 0
      %446 = vmatprep.subr.bf16.mxu0 0
      %447 = vmatpush1.bf16.msra.mxu0 0
      %448 = vmatprep.subr.bf16.mxu0 0
      %449 = vmatpush1.bf16.msra.mxu0 0
      %450 = vmatprep.mubr.bf16.mxu0 0
      %451 = vmatmul.mubr.bf16.gmra.mrb[0].mxu0 %v416
      %v452 = vpop.f32.mrb[0].mxu0
      %v453 = vadd.f32 %v402, %v452
      %v454 = vpop.f32.mrb[0].mxu0
      %v455 = vpop.f32.mrb[0].mxu0
      %v456 = vadd.f32 %v407, %v455
      %v457 = vpop.f32.mrb[0].mxu0
      %458 = vdwg.mxu0
      %v459 = vmax.f32 %v453, 0.0
      %v460 = vmax.f32 %v456, 0.0
      %v461 = vpack.c.bf16 %v460, %v459
      %v462 = vld [vmem:[%s5] sm:$0xf]
      %v463 = vld [vmem:[%s5 + $0x4] sm:$0xf]
      %v464 = vld [vmem:[%s5 + $0x8] sm:$0xf]
      %v465 = vld [vmem:[%s5 + $0xc] sm:$0xf]
      %v466 = vld [vmem:[%s6] sm:$0xff]
      %v467 = vld [vmem:[%s6 + $0x8] sm:$0xff]
      %v468 = vld [vmem:[%s6 + $0x10] sm:$0xff]
      %v469 = vld [vmem:[%s6 + $0x18] sm:$0xff]
      %471 = vset.pattern.permute.xlu0 0
      %472 = vperm.xlu0 %471, %v466
      %v473 = vpop.permute.xlu0 %472
      %476 = vset.pattern.permute.xlu0 0
      %477 = vperm.xlu0 %476, %v467
      %v478 = vpop.permute.xlu0 %477
      %481 = vset.pattern.permute.xlu0 0
      %482 = vperm.xlu0 %481, %v468
      %v483 = vpop.permute.xlu0 %482
      %486 = vset.pattern.permute.xlu0 0
      %487 = vperm.xlu0 %486, %v469
      %v488 = vpop.permute.xlu0 %487
      %v494 = vunpack.c.l.b16 %v462
      %v495 = vunpack.c.l.b16 %v463
      %v496 = vunpack.c.l.b16 %v464
      %v497 = vunpack.c.l.b16 %v465
      %v498 = vpack.c.b16 %v495, %v494
      %v499 = vpack.c.b16 %v497, %v496
      %v501 = vsel %vm414, %v498, 0
      %v504 = vsel %vm414, %v499, 0
      %506 = vmatprep.subr.bf16.mxu0 0
      %507 = vmatpush1.bf16.msra.mxu0 %v461
      %508 = vmatprep.subr.bf16.mxu0 0
      %509 = vmatpush1.bf16.msra.mxu0 0
      %510 = vmatprep.subr.bf16.mxu0 0
      %511 = vmatpush1.bf16.msra.mxu0 0
      %512 = vmatprep.subr.bf16.mxu0 0
      %513 = vmatpush1.bf16.msra.mxu0 0
      %514 = vmatprep.subr.bf16.mxu0 0
      %515 = vmatpush1.bf16.msra.mxu0 0
      %516 = vmatprep.subr.bf16.mxu0 0
      %517 = vmatpush1.bf16.msra.mxu0 0
      %518 = vmatprep.subr.bf16.mxu0 0
      %519 = vmatpush1.bf16.msra.mxu0 0
      %520 = vmatprep.subr.bf16.mxu0 0
      %521 = vmatpush1.bf16.msra.mxu0 0
      %522 = vmatprep.subr.bf16.mxu0 0
      %523 = vmatpush1.bf16.msra.mxu0 0
      %524 = vmatprep.subr.bf16.mxu0 0
      %525 = vmatpush1.bf16.msra.mxu0 0
      %526 = vmatprep.subr.bf16.mxu0 0
      %527 = vmatpush1.bf16.msra.mxu0 0
      %528 = vmatprep.subr.bf16.mxu0 0
      %529 = vmatpush1.bf16.msra.mxu0 0
      %530 = vmatprep.subr.bf16.mxu0 0
      %531 = vmatpush1.bf16.msra.mxu0 0
      %532 = vmatprep.subr.bf16.mxu0 0
      %533 = vmatpush1.bf16.msra.mxu0 0
      %534 = vmatprep.subr.bf16.mxu0 0
      %535 = vmatpush1.bf16.msra.mxu0 0
      %536 = vmatprep.subr.bf16.mxu0 0
      %537 = vmatpush1.bf16.msra.mxu0 0
      %538 = vmatprep.mubr.bf16.mxu0 0
      %539 = vmatmul.mubr.bf16.gmra.mrb[0].mxu0 %v501
      %v540 = vpop.f32.mrb[0].mxu0
      %v541 = vadd.f32 %v473, %v540
      %v542 = vpop.f32.mrb[0].mxu0
      %v543 = vpop.f32.mrb[0].mxu0
      %v544 = vadd.f32 %v478, %v543
      %v545 = vpop.f32.mrb[0].mxu0
      %546 = vmatprep.mubr.bf16.mxu0 0
      %547 = vmatmul.mubr.bf16.gmra.mrb[0].mxu0 %v504
      %v548 = vpop.f32.mrb[0].mxu0
      %v549 = vadd.f32 %v483, %v548
      %v550 = vpop.f32.mrb[0].mxu0
      %v551 = vpop.f32.mrb[0].mxu0
      %v552 = vadd.f32 %v488, %v551
      %v553 = vpop.f32.mrb[0].mxu0
      %554 = vdwg.mxu0
      %v555 = vmax.f32 %v541, 0.0
      %v556 = vmax.f32 %v544, 0.0
      %v557 = vmax.f32 %v549, 0.0
      %v558 = vmax.f32 %v552, 0.0
      %563 = vrot.lane.b32.xlu0 %v555, 112
      %v564 = vpop.permute.xlu0 %563
      %565 = vrot.lane.b32.xlu0 %v556, 112
      %v566 = vpop.permute.xlu0 %565
      %567 = vrot.lane.b32.xlu0 %v557, 112
      %v568 = vpop.permute.xlu0 %567
      %569 = vrot.lane.b32.xlu0 %v558, 112
      %v570 = vpop.permute.xlu0 %569
      %v575 = vmax.f32 %v555, %v564
      %v576 = vmax.f32 %v556, %v566
      %v577 = vmax.f32 %v557, %v568
      %v578 = vmax.f32 %v558, %v570
      %579 = vrot.lane.b32.xlu0 %v555, 96
      %v580 = vpop.permute.xlu0 %579
      %581 = vrot.lane.b32.xlu0 %v556, 96
      %v582 = vpop.permute.xlu0 %581
      %583 = vrot.lane.b32.xlu0 %v557, 96
      %v584 = vpop.permute.xlu0 %583
      %585 = vrot.lane.b32.xlu0 %v558, 96
      %v586 = vpop.permute.xlu0 %585
      %v591 = vmax.f32 %v575, %v580
      %v592 = vmax.f32 %v576, %v582
      %v593 = vmax.f32 %v577, %v584
      %v594 = vmax.f32 %v578, %v586
      %595 = vrot.lane.b32.xlu0 %v555, 80
      %v596 = vpop.permute.xlu0 %595
      %597 = vrot.lane.b32.xlu0 %v556, 80
      %v598 = vpop.permute.xlu0 %597
      %599 = vrot.lane.b32.xlu0 %v557, 80
      %v600 = vpop.permute.xlu0 %599
      %601 = vrot.lane.b32.xlu0 %v558, 80
      %v602 = vpop.permute.xlu0 %601
      %v607 = vmax.f32 %v591, %v596
      %v608 = vmax.f32 %v592, %v598
      %v609 = vmax.f32 %v593, %v600
      %v610 = vmax.f32 %v594, %v602
      %611 = vrot.lane.b32.xlu0 %v555, 64
      %v612 = vpop.permute.xlu0 %611
      %613 = vrot.lane.b32.xlu0 %v556, 64
      %v614 = vpop.permute.xlu0 %613
      %615 = vrot.lane.b32.xlu0 %v557, 64
      %v616 = vpop.permute.xlu0 %615
      %617 = vrot.lane.b32.xlu0 %v558, 64
      %v618 = vpop.permute.xlu0 %617
      %v623 = vmax.f32 %v607, %v612
      %v624 = vmax.f32 %v608, %v614
      %v625 = vmax.f32 %v609, %v616
      %v626 = vmax.f32 %v610, %v618
      %627 = vrot.lane.b32.xlu0 %v555, 48
      %v628 = vpop.permute.xlu0 %627
      %629 = vrot.lane.b32.xlu0 %v556, 48
      %v630 = vpop.permute.xlu0 %629
      %631 = vrot.lane.b32.xlu0 %v557, 48
      %v632 = vpop.permute.xlu0 %631
      %633 = vrot.lane.b32.xlu0 %v558, 48
      %v634 = vpop.permute.xlu0 %633
      %v639 = vmax.f32 %v623, %v628
      %v640 = vmax.f32 %v624, %v630
      %v641 = vmax.f32 %v625, %v632
      %v642 = vmax.f32 %v626, %v634
      %643 = vrot.lane.b32.xlu0 %v555, 32
      %v644 = vpop.permute.xlu0 %643
      %645 = vrot.lane.b32.xlu0 %v556, 32
      %v646 = vpop.permute.xlu0 %645
      %647 = vrot.lane.b32.xlu0 %v557, 32
      %v648 = vpop.permute.xlu0 %647
      %649 = vrot.lane.b32.xlu0 %v558, 32
      %v650 = vpop.permute.xlu0 %649
      %v655 = vmax.f32 %v639, %v644
      %v656 = vmax.f32 %v640, %v646
      %v657 = vmax.f32 %v641, %v648
      %v658 = vmax.f32 %v642, %v650
      %659 = vrot.lane.b32.xlu0 %v555, 16
      %v660 = vpop.permute.xlu0 %659
      %661 = vrot.lane.b32.xlu0 %v556, 16
      %v662 = vpop.permute.xlu0 %661
      %663 = vrot.lane.b32.xlu0 %v557, 16
      %v664 = vpop.permute.xlu0 %663
      %665 = vrot.lane.b32.xlu0 %v558, 16
      %v666 = vpop.permute.xlu0 %665
      %v671 = vmax.f32 %v655, %v660
      %v672 = vmax.f32 %v656, %v662
      %v673 = vmax.f32 %v657, %v664
      %v674 = vmax.f32 %v658, %v666
      %675 = vst.msk [vmem:[%s312] sm:$0xff] %vm414, %v671
      %676 = vst.msk [vmem:[%s312 + $0x8] sm:$0xff] %vm414, %v672
      %677 = vst.msk [vmem:[%s312 + $0x10] sm:$0xff] %vm414, %v673
      %678 = vst.msk [vmem:[%s312 + $0x18] sm:$0xff] %vm414, %v674
      %p679 = scmp.lt.s32.totalorder %s22, 1
      %s680 = scalar_select %p679, %s22, 1
      %p681 = scmp.lt.s32.totalorder %s23, 0
      %s682 = scalar_select %p681, %s23, 0
      %s683 = smul.addr %s680, 4
      %s684 = sadd.s32 %s682, %s683
      %s685 = smul.addr %s684, 8
      %s686 = scalar_lea.vmem %s7, %s685
      // Predicated region
      $region49: #{flow_embedding_forward.1} parent=47 // pred_check
        %p687 = pneg %p204
      $region50: #{flow_embedding_forward.1} parent=47 // pred_check_branch
        %689 = sbr.rel (%p687) target = $region52
      $region51: #{flow_embedding_forward.1} parent=47 // pred_region
        _
      $region52: #{flow_embedding_forward.1} parent=47 // pred_fallthru
        _
    $region48: #{flow_embedding_forward.1} parent=5 // pred_fallthru
      _
    %p690 = scmp.le.s32.totalorder 2, %s13
    // Predicated region
    $region53: #{flow_embedding_forward.1} parent=5 // pred_check
      %p691 = pneg %p690
    $region54: #{flow_embedding_forward.1} parent=5 // pred_check_branch
      %693 = sbr.rel (%p691) target = $region56
    $region55: #{flow_embedding_forward.1} parent=5 // pred_region
      %s694 = ssub.s32 %s13, 2
      // Predicated region
      $region57: #{flow_embedding_forward.1} parent=55 // pred_check
        %p695 = pneg %p210
      $region58: #{flow_embedding_forward.1} parent=55 // pred_check_branch
        %697 = sbr.rel (%p695) target = $region60
      $region59: #{flow_embedding_forward.1} parent=55 // pred_region
        %p698 = scmp.lt.s32.totalorder %s24, 1
        %s699 = scalar_select %p698, %s24, 1
        %p700 = scmp.lt.s32.totalorder %s25, 0
        %s701 = scalar_select %p700, %s25, 0
        %s702 = smul.addr %s699, 4
        %s703 = sadd.s32 %s701, %s702
        %s704 = smul.addr %s703, 8
        %s705 = scalar_lea.vmem %s7, %s704
      $region60: #{flow_embedding_forward.1} parent=55 // pred_fallthru
        _
    $region56: #{flow_embedding_forward.1} parent=5 // pred_fallthru
      _
  $region6: #{flow_embedding_forward.1} parent=0 // loop_footer
    %s17 = sadd.s32 1, %s13
  $region7: #{flow_embedding_forward.1} parent=0 // loop_footer_branch
    %12 = sbr.rel target = $region3
  $region8: #{flow_embedding_forward.1} parent=0 // loop_exit
    _

</llo_original>
